<compile_context>
chip_gen: v5e
topology: v5e:2x2
jax: 0.10.0
libtpu: 0.0.40
codegen_flags: <defaults>
</compile_context>

<pallas_src>
import functools

import jax
import jax.numpy as jnp
from jax.experimental import pallas as pl
from jax.experimental.pallas import tpu as pltpu


def _ce_sum_kernel(logits_ref, tgt_ref, out_ref, acc_ref, *,
                   num_classes, hw, tile_sub, tiles_per_split, needs_mask):
    sp = pl.program_id(1)
    p = pl.program_id(2)

    @pl.when(p == 0)
    def _():
        acc_ref[...] = jnp.zeros_like(acc_ref)

    tgt = tgt_ref[0]                                   # (tile_sub, 128) int32

    # Pass 1: running max over classes, one (tile_sub, 128) slice at a time (no (C,...) temp).
    m = logits_ref[0, 0].astype(jnp.float32)
    for k in range(1, num_classes):
        m = jnp.maximum(m, logits_ref[0, k].astype(jnp.float32))

    # Pass 2: exp-sum over classes + gather-free pick of the target-class logit.
    ssum = jnp.zeros((tile_sub, 128), jnp.float32)
    picked = jnp.zeros((tile_sub, 128), jnp.float32)
    for k in range(num_classes):
        xk = logits_ref[0, k].astype(jnp.float32)
        ssum = ssum + jnp.exp(xk - m)
        picked = picked + jnp.where(tgt == k, xk, 0.0)

    ce = (m + jnp.log(ssum)) - picked                  # (tile_sub, 128) per-pixel CE

    if needs_mask:
        # Padded pixels hold real zeros (no NaN risk); just drop their ce contribution.
        row = jax.lax.broadcasted_iota(jnp.int32, (tile_sub, 128), 0)
        lane = jax.lax.broadcasted_iota(jnp.int32, (tile_sub, 128), 1)
        pix = ((sp * tiles_per_split + p) * tile_sub + row) * 128 + lane
        ce = jnp.where(pix < hw, ce, 0.0)

    # Fold to a single (8, 128) vreg with pure vreg-wise VPU adds, then accumulate.
    part = ce[0:8, :]
    for g in range(1, tile_sub // 8):
        part = part + ce[g * 8:(g + 1) * 8, :]
    acc_ref[...] += part

    @pl.when(p == pl.num_programs(2) - 1)
    def _():
        out_ref[0, 0] = acc_ref[...]


def cross_entropy_sum_pallas(logits, targets, hw, *, vmem_budget_bytes=8 * 1024 * 1024):
    """Sum of per-pixel cross-entropy over all N*hw pixels.

    logits:  (N, C, hw) float (any float dtype; upcast to f32 in-kernel).
    targets: (N, hw) int32.
    Returns a scalar f32.
    """
    n, c, _ = logits.shape
    itemsize = jnp.dtype(logits.dtype).itemsize

    rows_needed = -(-hw // 128)                        # 128-pixel rows actually holding data

    # Tile sizing: budget covers double-buffered logits+targets blocks plus ~4 f32
    # (tile_sub, 128) in-kernel temporaries; cap at 512 rows (per-step overhead amortized).
    per_row = 2 * (c * 128 * itemsize + 128 * 4) + 4 * 128 * 4
    tile_sub = (vmem_budget_bytes // per_row) // 8 * 8
    tile_sub = max(8, min(512, tile_sub))
    tile_sub = min(tile_sub, max(8, -(-rows_needed // 8) * 8))

    num_tiles = max(1, -(-rows_needed // tile_sub))
    # Megacore (v7x): when the batch axis alone cannot balance 2 TensorCores, split pixel tiles.
    n_split = 2 if (n % 2 == 1 and num_tiles >= 2) else 1
    tiles_per_split = -(-num_tiles // n_split)

    s = n_split * tiles_per_split * tile_sub           # padded row count -> exact tiling
    hw_pad = s * 128
    needs_mask = hw_pad != hw

    if needs_mask:
        logits = jnp.pad(logits, ((0, 0), (0, 0), (0, hw_pad - hw)))
        targets = jnp.pad(targets, ((0, 0), (0, hw_pad - hw)))
    logits4d = logits.reshape(n, c, s, 128)
    tgts3d = targets.reshape(n, s, 128)

    kernel = functools.partial(
        _ce_sum_kernel, num_classes=c, hw=hw, tile_sub=tile_sub,
        tiles_per_split=tiles_per_split, needs_mask=needs_mask)

    cost = pl.CostEstimate(
        flops=8 * n * c * hw_pad,
        transcendentals=(c + 1) * n * hw_pad,
        bytes_accessed=n * c * hw_pad * itemsize + 4 * n * hw_pad + n * n_split * 8 * 128 * 4,
    )

    out = pl.pallas_call(
        kernel,
        out_shape=jax.ShapeDtypeStruct((n, n_split, 8, 128), jnp.float32),
        grid_spec=pltpu.PrefetchScalarGridSpec(
            num_scalar_prefetch=0,
            grid=(n, n_split, tiles_per_split),
            in_specs=[
                # NOTE(v5e): add pipeline_mode=pl.Buffered(3) here if profiling shows exposed DMA.
                pl.BlockSpec((1, c, tile_sub, 128),
                             lambda b, sp, p: (b, 0, sp * tiles_per_split + p, 0)),
                pl.BlockSpec((1, tile_sub, 128),
                             lambda b, sp, p: (b, sp * tiles_per_split + p, 0)),
            ],
            out_specs=pl.BlockSpec((1, 1, 8, 128), lambda b, sp, p: (b, sp, 0, 0)),
            scratch_shapes=[pltpu.VMEM((8, 128), jnp.float32)],
        ),
        compiler_params=pltpu.CompilerParams(
            dimension_semantics=("parallel", "parallel", "arbitrary"),
            vmem_limit_bytes=32 * 1024 * 1024,
        ),
        cost_estimate=cost,
    )(logits4d, tgts3d)

    # (N, n_split, 8, 128) per-core partial sums -> scalar (one tiny XLA reduce).
    return jnp.sum(out)


def focal_loss(inputs, targets, *, alpha=0.25, gamma=2.0, size_average=True,
               ignore_index=255):
    """inputs: (N, C, H, W) float logits (NCHW, like PyTorch); targets: (N, H, W) int."""
    # TODO(synk): alpha / ignore_index / size_average are accepted but unused, exactly like the
    # reference PyTorch forward (it calls plain CrossEntropyLoss(reduction='mean')).
    n, c, h, w = inputs.shape
    hw = h * w
    ce_sum = cross_entropy_sum_pallas(
        inputs.reshape(n, c, hw), targets.reshape(n, hw).astype(jnp.int32), hw)
    logp = ce_sum / jnp.float32(n * hw)                # mean cross-entropy (scalar)
    p = jnp.exp(-logp)
    loss = (1.0 - p) ** gamma * logp
    return loss                                        # .mean() of a scalar is itself


if __name__ == "__main__":
    key = jax.random.PRNGKey(0)
    k1, k2 = jax.random.split(key)

    N, C, H, W = 2, 4, 16, 16
    inputs = jax.random.normal(k1, (N, C, H, W), dtype=jnp.float32)
    targets = jax.random.randint(k2, (N, H, W), 0, C, dtype=jnp.int32)

    loss = focal_loss(inputs, targets, alpha=0.25, gamma=2.0)
    loss = jax.block_until_ready(loss)

    # Pure-JAX reference check (same math, no Pallas).
    logits2d = jnp.transpose(inputs, (0, 2, 3, 1)).reshape(-1, C)
    tgt = targets.reshape(-1)
    lse = jax.scipy.special.logsumexp(logits2d, axis=-1)
    picked = jnp.take_along_axis(logits2d, tgt[:, None], axis=-1)[:, 0]
    logp_ref = jnp.mean(lse - picked)
    p_ref = jnp.exp(-logp_ref)
    ref = (1.0 - p_ref) ** 2.0 * logp_ref

    assert jnp.allclose(loss, ref, rtol=1e-5, atol=1e-5), (loss, ref)
    print("KERNEL_OK")
</pallas_src>

<mosaic_0001>
module attributes {stable_mosaic.version = 11 : i64} {
  func.func @_ce_sum_kernel(%arg0: i32, %arg1: i32, %arg2: i32, %arg3: memref<1x4x8x128xf32, #tpu.memory_space<vmem>>, %arg4: memref<1x8x128xi32, #tpu.memory_space<vmem>>, %arg5: memref<1x1x8x128xf32, #tpu.memory_space<vmem>>, %arg6: memref<8x128xf32, #tpu.memory_space<vmem>>) attributes {dimension_semantics = [#tpu.dimension_semantics<parallel>, #tpu.dimension_semantics<parallel>, #tpu.dimension_semantics<arbitrary>], iteration_bounds = array<i64: 2, 1, 1>, scalar_prefetch = 0 : i64, scratch_operands = 1 : i64, tpu.core_type = #tpu.core_type<tc>, window_params = [{transform_indices = @transform_0, window_bounds = array<i64: 1, 4, 8, 128>}, {transform_indices = @transform_1, window_bounds = array<i64: 1, 8, 128>}, {transform_indices = @transform_2, window_bounds = array<i64: 1, 1, 8, 128>}]} {
    %c0_i32 = arith.constant 0 : i32
    %0 = arith.cmpi eq, %arg2, %c0_i32 : i32
    %1 = arith.extui %0 : i1 to i32
    %c0_i32_0 = arith.constant 0 : i32
    %2 = arith.cmpi ne, %1, %c0_i32_0 : i32
    scf.if %2 {
      %cst_46 = arith.constant 0.000000e+00 : f32
      %81 = vector.broadcast %cst_46 : f32 to vector<8x128xf32>
      %c0_47 = arith.constant 0 : index
      %c0_48 = arith.constant 0 : index
      %82 = vector.load %arg6[%c0_47, %c0_48] : memref<8x128xf32, #tpu.memory_space<vmem>>, vector<8x128xf32>
      tpu.vector_store %arg6[%c0_47, %c0_48], %81 {strides = array<i32>} : memref<8x128xf32, #tpu.memory_space<vmem>>, vector<8x128xf32>,
    } else {
    }
    %c0 = arith.constant 0 : index
    %c0_1 = arith.constant 0 : index
    %c0_2 = arith.constant 0 : index
    %3 = vector.load %arg4[%c0, %c0_1, %c0_2] : memref<1x8x128xi32, #tpu.memory_space<vmem>>, vector<1x8x128xi32>
    %4 = vector.shape_cast %3 : vector<1x8x128xi32> to vector<8x128xi32>
    %c0_3 = arith.constant 0 : index
    %c0_4 = arith.constant 0 : index
    %c0_5 = arith.constant 0 : index
    %c0_6 = arith.constant 0 : index
    %5 = vector.load %arg3[%c0_3, %c0_4, %c0_5, %c0_6] : memref<1x4x8x128xf32, #tpu.memory_space<vmem>>, vector<1x1x8x128xf32>
    %6 = vector.shape_cast %5 : vector<1x1x8x128xf32> to vector<8x128xf32>
    %c0_7 = arith.constant 0 : index
    %c1 = arith.constant 1 : index
    %c0_8 = arith.constant 0 : index
    %c0_9 = arith.constant 0 : index
    %7 = vector.load %arg3[%c0_7, %c1, %c0_8, %c0_9] : memref<1x4x8x128xf32, #tpu.memory_space<vmem>>, vector<1x1x8x128xf32>
    %8 = vector.shape_cast %7 : vector<1x1x8x128xf32> to vector<8x128xf32>
    %9 = arith.maximumf %6, %8 : vector<8x128xf32>
    %c0_10 = arith.constant 0 : index
    %c2 = arith.constant 2 : index
    %c0_11 = arith.constant 0 : index
    %c0_12 = arith.constant 0 : index
    %10 = vector.load %arg3[%c0_10, %c2, %c0_11, %c0_12] : memref<1x4x8x128xf32, #tpu.memory_space<vmem>>, vector<1x1x8x128xf32>
    %11 = vector.shape_cast %10 : vector<1x1x8x128xf32> to vector<8x128xf32>
    %12 = arith.maximumf %9, %11 : vector<8x128xf32>
    %c0_13 = arith.constant 0 : index
    %c3 = arith.constant 3 : index
    %c0_14 = arith.constant 0 : index
    %c0_15 = arith.constant 0 : index
    %13 = vector.load %arg3[%c0_13, %c3, %c0_14, %c0_15] : memref<1x4x8x128xf32, #tpu.memory_space<vmem>>, vector<1x1x8x128xf32>
    %14 = vector.shape_cast %13 : vector<1x1x8x128xf32> to vector<8x128xf32>
    %15 = arith.maximumf %12, %14 : vector<8x128xf32>
    %cst = arith.constant 0.000000e+00 : f32
    %16 = vector.broadcast %cst : f32 to vector<8x128xf32>
    %cst_16 = arith.constant 0.000000e+00 : f32
    %17 = vector.broadcast %cst_16 : f32 to vector<8x128xf32>
    %c0_17 = arith.constant 0 : index
    %c0_18 = arith.constant 0 : index
    %c0_19 = arith.constant 0 : index
    %c0_20 = arith.constant 0 : index
    %18 = vector.load %arg3[%c0_17, %c0_18, %c0_19, %c0_20] : memref<1x4x8x128xf32, #tpu.memory_space<vmem>>, vector<1x1x8x128xf32>
    %19 = vector.shape_cast %18 : vector<1x1x8x128xf32> to vector<8x128xf32>
    %20 = arith.subf %19, %15 : vector<8x128xf32>
    %21 = math.exp %20 : vector<8x128xf32>
    %22 = arith.addf %16, %21 : vector<8x128xf32>
    %c0_i32_21 = arith.constant 0 : i32
    %23 = vector.broadcast %c0_i32_21 : i32 to vector<8x128xi32>
    %24 = arith.cmpi eq, %4, %23 : vector<8x128xi32>
    %cst_22 = arith.constant 0.000000e+00 : f32
    %25 = vector.broadcast %cst_22 : f32 to vector<8x128xf32>
    %26 = arith.select %24, %19, %25 : vector<8x128xi1>, vector<8x128xf32>
    %27 = arith.addf %17, %26 : vector<8x128xf32>
    %c0_23 = arith.constant 0 : index
    %c1_24 = arith.constant 1 : index
    %c0_25 = arith.constant 0 : index
    %c0_26 = arith.constant 0 : index
    %28 = vector.load %arg3[%c0_23, %c1_24, %c0_25, %c0_26] : memref<1x4x8x128xf32, #tpu.memory_space<vmem>>, vector<1x1x8x128xf32>
    %29 = vector.shape_cast %28 : vector<1x1x8x128xf32> to vector<8x128xf32>
    %30 = arith.subf %29, %15 : vector<8x128xf32>
    %31 = math.exp %30 : vector<8x128xf32>
    %32 = arith.addf %22, %31 : vector<8x128xf32>
    %c1_i32 = arith.constant 1 : i32
    %33 = vector.broadcast %c1_i32 : i32 to vector<8x128xi32>
    %34 = arith.cmpi eq, %4, %33 : vector<8x128xi32>
    %cst_27 = arith.constant 0.000000e+00 : f32
    %35 = vector.broadcast %cst_27 : f32 to vector<8x128xf32>
    %36 = arith.select %34, %29, %35 : vector<8x128xi1>, vector<8x128xf32>
    %37 = arith.addf %27, %36 : vector<8x128xf32>
    %c0_28 = arith.constant 0 : index
    %c2_29 = arith.constant 2 : index
    %c0_30 = arith.constant 0 : index
    %c0_31 = arith.constant 0 : index
    %38 = vector.load %arg3[%c0_28, %c2_29, %c0_30, %c0_31] : memref<1x4x8x128xf32, #tpu.memory_space<vmem>>, vector<1x1x8x128xf32>
    %39 = vector.shape_cast %38 : vector<1x1x8x128xf32> to vector<8x128xf32>
    %40 = arith.subf %39, %15 : vector<8x128xf32>
    %41 = math.exp %40 : vector<8x128xf32>
    %42 = arith.addf %32, %41 : vector<8x128xf32>
    %c2_i32 = arith.constant 2 : i32
    %43 = vector.broadcast %c2_i32 : i32 to vector<8x128xi32>
    %44 = arith.cmpi eq, %4, %43 : vector<8x128xi32>
    %cst_32 = arith.constant 0.000000e+00 : f32
    %45 = vector.broadcast %cst_32 : f32 to vector<8x128xf32>
    %46 = arith.select %44, %39, %45 : vector<8x128xi1>, vector<8x128xf32>
    %47 = arith.addf %37, %46 : vector<8x128xf32>
    %c0_33 = arith.constant 0 : index
    %c3_34 = arith.constant 3 : index
    %c0_35 = arith.constant 0 : index
    %c0_36 = arith.constant 0 : index
    %48 = vector.load %arg3[%c0_33, %c3_34, %c0_35, %c0_36] : memref<1x4x8x128xf32, #tpu.memory_space<vmem>>, vector<1x1x8x128xf32>
    %49 = vector.shape_cast %48 : vector<1x1x8x128xf32> to vector<8x128xf32>
    %50 = arith.subf %49, %15 : vector<8x128xf32>
    %51 = math.exp %50 : vector<8x128xf32>
    %52 = arith.addf %42, %51 : vector<8x128xf32>
    %c3_i32 = arith.constant 3 : i32
    %53 = vector.broadcast %c3_i32 : i32 to vector<8x128xi32>
    %54 = arith.cmpi eq, %4, %53 : vector<8x128xi32>
    %cst_37 = arith.constant 0.000000e+00 : f32
    %55 = vector.broadcast %cst_37 : f32 to vector<8x128xf32>
    %56 = arith.select %54, %49, %55 : vector<8x128xi1>, vector<8x128xf32>
    %57 = arith.addf %47, %56 : vector<8x128xf32>
    %58 = math.log %52 : vector<8x128xf32>
    %59 = arith.addf %15, %58 : vector<8x128xf32>
    %60 = arith.subf %59, %57 : vector<8x128xf32>
    %61 = tpu.iota {dimensions = array<i32: 0>} : vector<8x128xi32>
    %62 = tpu.iota {dimensions = array<i32: 1>} : vector<8x128xi32>
    %c1_i32_38 = arith.constant 1 : i32
    %63 = arith.muli %arg1, %c1_i32_38 : i32
    %64 = arith.addi %63, %arg2 : i32
    %c8_i32 = arith.constant 8 : i32
    %65 = arith.muli %64, %c8_i32 : i32
    %66 = vector.broadcast %65 : i32 to vector<8x128xi32>
    %67 = arith.addi %66, %61 : vector<8x128xi32>
    %c128_i32 = arith.constant 128 : i32
    %68 = vector.broadcast %c128_i32 : i32 to vector<8x128xi32>
    %69 = arith.muli %67, %68 : vector<8x128xi32>
    %70 = arith.addi %69, %62 : vector<8x128xi32>
    %c256_i32 = arith.constant 256 : i32
    %71 = vector.broadcast %c256_i32 : i32 to vector<8x128xi32>
    %72 = arith.cmpi slt, %70, %71 : vector<8x128xi32>
    %cst_39 = arith.constant 0.000000e+00 : f32
    %73 = vector.broadcast %cst_39 : f32 to vector<8x128xf32>
    %74 = arith.select %72, %60, %73 : vector<8x128xi1>, vector<8x128xf32>
    %c0_40 = arith.constant 0 : index
    %c0_41 = arith.constant 0 : index
    %75 = vector.load %arg6[%c0_40, %c0_41] : memref<8x128xf32, #tpu.memory_space<vmem>>, vector<8x128xf32>
    %76 = arith.addf %75, %74 : vector<8x128xf32>
    %c0_42 = arith.constant 0 : index
    %c0_43 = arith.constant 0 : index
    %77 = vector.load %arg6[%c0_42, %c0_43] : memref<8x128xf32, #tpu.memory_space<vmem>>, vector<8x128xf32>
    tpu.vector_store %arg6[%c0_42, %c0_43], %76 {strides = array<i32>} : memref<8x128xf32, #tpu.memory_space<vmem>>, vector<8x128xf32>,
    %c0_i32_44 = arith.constant 0 : i32
    %78 = arith.cmpi eq, %arg2, %c0_i32_44 : i32
    %79 = arith.extui %78 : i1 to i32
    %c0_i32_45 = arith.constant 0 : i32
    %80 = arith.cmpi ne, %79, %c0_i32_45 : i32
    scf.if %80 {
      %c0_46 = arith.constant 0 : index
      %c0_47 = arith.constant 0 : index
      %81 = vector.load %arg6[%c0_46, %c0_47] : memref<8x128xf32, #tpu.memory_space<vmem>>, vector<8x128xf32>
      %c0_48 = arith.constant 0 : index
      %c0_49 = arith.constant 0 : index
      %c0_50 = arith.constant 0 : index
      %c0_51 = arith.constant 0 : index
      %82 = vector.load %arg5[%c0_48, %c0_49, %c0_50, %c0_51] : memref<1x1x8x128xf32, #tpu.memory_space<vmem>>, vector<1x1x8x128xf32>
      %83 = vector.shape_cast %82 : vector<1x1x8x128xf32> to vector<8x128xf32>
      %84 = vector.shape_cast %81 : vector<8x128xf32> to vector<1x1x8x128xf32>
      tpu.vector_store %arg5[%c0_48, %c0_49, %c0_50, %c0_51], %84 {strides = array<i32>} : memref<1x1x8x128xf32, #tpu.memory_space<vmem>>, vector<1x1x8x128xf32>,
    } else {
    }
    return
  }
  func.func @transform_0(%arg0: i32, %arg1: i32, %arg2: i32) -> (i32, i32, i32, i32) {
    %c1_i32 = arith.constant 1 : i32
    %0 = arith.muli %arg1, %c1_i32 : i32
    %1 = arith.addi %0, %arg2 : i32
    %c0_i32 = arith.constant 0 : i32
    %c0_i32_0 = arith.constant 0 : i32
    %c0_i32_1 = arith.constant 0 : i32
    return %arg0, %c0_i32, %1, %c0_i32_0 : i32, i32, i32, i32
  }
  func.func @transform_1(%arg0: i32, %arg1: i32, %arg2: i32) -> (i32, i32, i32) {
    %c1_i32 = arith.constant 1 : i32
    %0 = arith.muli %arg1, %c1_i32 : i32
    %1 = arith.addi %0, %arg2 : i32
    %c0_i32 = arith.constant 0 : i32
    %c0_i32_0 = arith.constant 0 : i32
    return %arg0, %1, %c0_i32 : i32, i32, i32
  }
  func.func @transform_2(%arg0: i32, %arg1: i32, %arg2: i32) -> (i32, i32, i32, i32) {
    %c0_i32 = arith.constant 0 : i32
    %c0_i32_0 = arith.constant 0 : i32
    %c0_i32_1 = arith.constant 0 : i32
    return %arg0, %arg1, %c0_i32, %c0_i32_0 : i32, i32, i32, i32
  }
}

</mosaic_0001>

<llo_original>
// kernel: tpu_custom_call.1
$region0: #{tpu_custom_call.1}
  #allocation0 [shape = 'u32[]', space=smem, size = 0x4, offset = 0x4, fixed_abs, tag = 'smem constant byte address 0x4 - core index']
  #allocation1 [shape = 'u32[72,128]{1,0:T(1,128)}', space=vmem, size = 0x9000, scoped, tag = 'internal scratch']
  #allocation2 [shape = 'f32[8,128]{1,0:T(8,128)}', space=vmem, size = 0x1000, scoped, tag = 'scratch operand']
  %s0 = inlined_call_operand.hbm [shape: f32[2,4,8,128], index: 0, kind: input, shape index: {}]
  %s1 = inlined_call_operand.hbm [shape: s32[2,8,128], index: 1, kind: input, shape index: {}]
  %s2 = inlined_call_operand.hbm [shape: f32[2,1,8,128], index: 2, kind: output, shape index: {}]
  %s3 = sld [smem:[#allocation0]]
  $region57: #{tpu_custom_call.1} parent=0
    _
  %s5 = ssub.s32 1, %s3
  %s6 = scalar_select 0, %s5, %s3
  $region1: #{tpu_custom_call.1} parent=0
    #allocation3 [shape = 'u8[32768]{0}', space=vmem, size = 0x8000, scoped, tag = 'input window, operand 0']
    #allocation4 [shape = 's32[2]{0}', space=sflag, size = 0x8, scoped, tag = 'scoped memory for tpu_custom_call.1']
    #allocation5 [shape = 's32[2]{0}', space=sflag, size = 0x8, scoped, tag = 'scoped memory for tpu_custom_call.1']
    #allocation6 [shape = 'u8[8192]{0}', space=vmem, size = 0x2000, scoped, tag = 'input window, operand 1']
    #allocation7 [shape = 's32[2]{0}', space=sflag, size = 0x8, scoped, tag = 'scoped memory for tpu_custom_call.1']
    #allocation8 [shape = 'u8[8192]{0}', space=vmem, size = 0x2000, scoped, tag = 'output window, operand 0']
    %7 = vsyncpa [#allocation4], 0
    %s8 = scalar_lea.sflag [#allocation4], 1
    %9 = vsyncpa %s8, 0
    %10 = vsyncpa [#allocation7], 0
    %s11 = scalar_lea.sflag [#allocation7], 1
    %12 = vsyncpa %s11, 0
    %13 = vsyncpa [#allocation5], 0
    %s14 = scalar_lea.sflag [#allocation5], 1
    %15 = vsyncpa %s14, 0
    loop: start=0, step=1, limit=4
    $region2: #{tpu_custom_call.1} parent=1 // loop_pre_header
      _
    $region3: #{tpu_custom_call.1} parent=1 // loop_header
      %s17 = sphi 0, %s21
      %p18 = scmp.ge.s32.totalorder %s17, 4
      %s24 = sphi 0, %s43
      %s25 = sphi 0, %s39
      %s26 = sphi 0, %s35
      %s27 = sphi 0, %s24
      %s28 = sphi 0, %s25
      %s29 = sphi 0, %s26
      %s30 = sphi 0, %s27
      %s31 = sphi 0, %s28
      %s32 = sphi 0, %s29
      %s50 = sphi 0, %s52
      %s53 = sphi 0, %s50
      %s54 = sphi 0, %s53
      %s70 = sphi 0, %s54
      %s80 = sphi 0, %s82
      %s83 = sphi 0, %s80
      %s84 = sphi 0, %s83
      %s100 = sphi 0, %s84
      %s108 = sphi 0, %s110
      %s111 = sphi 0, %s108
      %s112 = sphi 0, %s111
      %s128 = sphi 0, %s112
    $region4: #{tpu_custom_call.1} parent=1 // loop_header_branch
      %20 = sbr.rel (%p18) target = $region8
    $region5: #{tpu_custom_call.1} parent=1 // loop_body
      %s22 = ssub.s32 %s17, 1
      %s23 = ssub.s32 %s17, 2
      %s33 = sadd.s32 1, %s26
      %p34 = scmp.ge.s32.totalorder %s33, 1
      %s35 = scalar_select %p34, 0, %s33
      %s36 = sadd.s32 1, %s25
      %s37 = scalar_select %p34, %s36, %s25
      %p38 = scmp.ge.s32.totalorder %s37, 1
      %s39 = scalar_select %p38, 0, %s37
      %s40 = sadd.s32 1, %s24
      %s41 = scalar_select %p38, %s40, %s24
      %p42 = scmp.ge.s32.totalorder %s41, 2
      %s43 = scalar_select %p42, 0, %s41
      %s44 = sadd.s32 %s25, %s26
      %s45 = sadd.s32 %s39, %s35
      %s46 = ssub.s32 %s24, %s43
      %s47 = ssub.s32 %s44, %s45
      %s48 = sor.u32 %s46, %s47
      %p49 = scmp.eq.s32.totalorder %s48, 0
      %s51 = sadd.s32 %s50, 1
      %s52 = scalar_select %p49, %s50, %s51
      %p55 = pneg %p49
      %p56 = scmp.eq.s32.totalorder %s17, 1
      %p57 = por %p55, %p56
      %p58 = scmp.ne.s32.totalorder %s50, %s53
      %p59 = scmp.eq.s32.totalorder %s17, 0
      %p60 = por %p58, %p59
      %p61 = scmp.ne.s32.totalorder %s50, %s53
      %p62 = scmp.eq.s32.totalorder %s22, 1
      %p63 = por %p61, %p62
      %p64 = scmp.ne.s32.totalorder %s53, %s54
      %p65 = scmp.eq.s32.totalorder %s22, 0
      %p66 = por %p64, %p65
      %p67 = scmp.ne.s32.totalorder %s53, %s54
      %p68 = scmp.eq.s32.totalorder %s23, 1
      %p69 = por %p67, %p68
      %p71 = scmp.ne.s32.totalorder %s54, %s70
      %p72 = scmp.eq.s32.totalorder %s23, 0
      %p73 = por %p71, %p72
      %s74 = sadd.s32 %s25, %s26
      %s75 = sadd.s32 %s39, %s35
      %s76 = ssub.s32 %s24, %s43
      %s77 = ssub.s32 %s74, %s75
      %s78 = sor.u32 %s76, %s77
      %p79 = scmp.eq.s32.totalorder %s78, 0
      %s81 = sadd.s32 %s80, 1
      %s82 = scalar_select %p79, %s80, %s81
      %p85 = pneg %p79
      %p86 = scmp.eq.s32.totalorder %s17, 1
      %p87 = por %p85, %p86
      %p88 = scmp.ne.s32.totalorder %s80, %s83
      %p89 = scmp.eq.s32.totalorder %s17, 0
      %p90 = por %p88, %p89
      %p91 = scmp.ne.s32.totalorder %s80, %s83
      %p92 = scmp.eq.s32.totalorder %s22, 1
      %p93 = por %p91, %p92
      %p94 = scmp.ne.s32.totalorder %s83, %s84
      %p95 = scmp.eq.s32.totalorder %s22, 0
      %p96 = por %p94, %p95
      %p97 = scmp.ne.s32.totalorder %s83, %s84
      %p98 = scmp.eq.s32.totalorder %s23, 1
      %p99 = por %p97, %p98
      %p101 = scmp.ne.s32.totalorder %s84, %s100
      %p102 = scmp.eq.s32.totalorder %s23, 0
      %p103 = por %p101, %p102
      %s104 = ssub.s32 %s24, %s43
      %s105 = ssub.s32 %s25, %s39
      %s106 = sor.u32 %s104, %s105
      %p107 = scmp.eq.s32.totalorder %s106, 0
      %s109 = sadd.s32 %s108, 1
      %s110 = scalar_select %p107, %s108, %s109
      %p113 = pneg %p107
      %p114 = scmp.eq.s32.totalorder %s17, 1
      %p115 = por %p113, %p114
      %p116 = scmp.ne.s32.totalorder %s108, %s111
      %p117 = scmp.eq.s32.totalorder %s17, 0
      %p118 = por %p116, %p117
      %p119 = scmp.ne.s32.totalorder %s108, %s111
      %p120 = scmp.eq.s32.totalorder %s22, 1
      %p121 = por %p119, %p120
      %p122 = scmp.ne.s32.totalorder %s111, %s112
      %p123 = scmp.eq.s32.totalorder %s22, 0
      %p124 = por %p122, %p123
      %p125 = scmp.ne.s32.totalorder %s111, %s112
      %p126 = scmp.eq.s32.totalorder %s23, 1
      %p127 = por %p125, %p126
      %p129 = scmp.ne.s32.totalorder %s112, %s128
      %p130 = scmp.eq.s32.totalorder %s23, 0
      %p131 = por %p129, %p130
      %p132 = scmp.le.s32.totalorder 1, %s17
      %p133 = scmp.lt.s32.totalorder %s17, 3
      %p134 = pnand %p132, %p133
      %p135 = pneg %p134
      // Predicated region
      $region9: #{tpu_custom_call.1} parent=5 // pred_check
        _
      $region10: #{tpu_custom_call.1} parent=5 // pred_check_branch
        %137 = sbr.rel (%p134) target = $region12
      $region11: #{tpu_custom_call.1} parent=5 // pred_region
        %s138 = ssub.s32 %s17, 1
      $region12: #{tpu_custom_call.1} parent=5 // pred_fallthru
        _
      %p139 = scmp.lt.s32.totalorder %s17, 2
      // Predicated region
      $region13: #{tpu_custom_call.1} parent=5 // pred_check
        %p140 = pneg %p139
      $region14: #{tpu_custom_call.1} parent=5 // pred_check_branch
        %142 = sbr.rel (%p140) target = $region16
      $region15: #{tpu_custom_call.1} parent=5 // pred_region
        // Predicated region
        $region17: #{tpu_custom_call.1} parent=15 // pred_check
          %p143 = pneg %p60
        $region18: #{tpu_custom_call.1} parent=15 // pred_check_branch
          %145 = sbr.rel (%p143) target = $region20
        $region19: #{tpu_custom_call.1} parent=15 // pred_region
          %s146 = sand.u32 %s50, 1
          %s147 = scalar_lea.sflag [#allocation4], %s146
          %s148 = sand.u32 %s50, 1
          %s149 = smul.addr %s148, 32
          %s150 = scalar_lea.vmem [#allocation3], %s149
          %s151 = sadd.s32 %s25, %s26
          %153 = vsyncadd %s147, 0
          %s154 = smul.addr %s24, 4
          %s155 = sadd.s32 %s151, %s154
          %s156 = smul.addr %s155, 8
          %s157 = scalar_lea.hbm %s0, %s156
          %s158 = sshll.u32 %s157, 4
          %s159 = int_to_ptr.hbm [resolvable:$true] %s158
          %s160 = sshll.u32 %s150, 4
          %s161 = int_to_ptr.vmem [resolvable:$true] %s160
          %166 = dma.hbm_to_vmem [thread:$0]  %s159, 512, %s161, %s147, 128, 128, 8
        $region20: #{tpu_custom_call.1} parent=15 // pred_fallthru
          _
        // Predicated region
        $region21: #{tpu_custom_call.1} parent=15 // pred_check
          %p167 = pneg %p90
        $region22: #{tpu_custom_call.1} parent=15 // pred_check_branch
          %169 = sbr.rel (%p167) target = $region24
        $region23: #{tpu_custom_call.1} parent=15 // pred_region
          %s170 = sand.u32 %s80, 1
          %s171 = scalar_lea.sflag [#allocation7], %s170
          %s172 = sand.u32 %s80, 1
          %s173 = smul.addr %s172, 8
          %s174 = scalar_lea.vmem [#allocation6], %s173
          %s175 = sadd.s32 %s25, %s26
          %177 = vsyncadd %s171, 0
          %s178 = sadd.s32 %s175, %s24
          %s179 = smul.addr %s178, 8
          %s180 = scalar_lea.hbm %s1, %s179
          %s182 = sshll.u32 %s180, 4
          %s183 = int_to_ptr.hbm [resolvable:$true] %s182
          %s184 = sshll.u32 %s174, 4
          %s185 = int_to_ptr.vmem [resolvable:$true] %s184
          %187 = dma.hbm_to_vmem [thread:$0]  %s183, 128, %s185, %s171
        $region24: #{tpu_custom_call.1} parent=15 // pred_fallthru
          _
      $region16: #{tpu_custom_call.1} parent=5 // pred_fallthru
        _
      %p188 = scmp.le.s32.totalorder 1, %s17
      %p189 = scmp.lt.s32.totalorder %s17, 3
      %p190 = pnand %p188, %p189
      %p191 = pneg %p190
      // Predicated region
      $region25: #{tpu_custom_call.1} parent=5 // pred_check
        _
      $region26: #{tpu_custom_call.1} parent=5 // pred_check_branch
        %193 = sbr.rel (%p190) target = $region28
      $region27: #{tpu_custom_call.1} parent=5 // pred_region
        %s194 = ssub.s32 %s17, 1
        %s195 = sand.u32 %s53, 1
        %s196 = scalar_lea.sflag [#allocation4], %s195
        %s197 = sand.u32 %s53, 1
        %s198 = smul.addr %s197, 32
        %s199 = scalar_lea.vmem [#allocation3], %s198
        // Predicated region
        $region29: #{tpu_custom_call.1} parent=27 // pred_check
          %p200 = pneg %p66
        $region30: #{tpu_custom_call.1} parent=27 // pred_check_branch
          %202 = sbr.rel (%p200) target = $region32
        $region31: #{tpu_custom_call.1} parent=27 // pred_region
          %204 = dma.done %s196, 512
        $region32: #{tpu_custom_call.1} parent=27 // pred_fallthru
          _
        %s205 = sand.u32 %s83, 1
        %s206 = scalar_lea.sflag [#allocation7], %s205
        %s207 = sand.u32 %s83, 1
        %s208 = smul.addr %s207, 8
        %s209 = scalar_lea.vmem [#allocation6], %s208
        // Predicated region
        $region33: #{tpu_custom_call.1} parent=27 // pred_check
          %p210 = pneg %p96
        $region34: #{tpu_custom_call.1} parent=27 // pred_check_branch
          %212 = sbr.rel (%p210) target = $region36
        $region35: #{tpu_custom_call.1} parent=27 // pred_region
          %214 = dma.done %s206, 128
        $region36: #{tpu_custom_call.1} parent=27 // pred_fallthru
          _
        %s215 = sand.u32 %s53, 1
        %s216 = scalar_lea.sflag [#allocation4], %s215
        %s217 = sand.u32 %s53, 1
        %s218 = smul.addr %s217, 32
        %s219 = scalar_lea.vmem [#allocation3], %s218
        %p220 = pneg %p66
        %p221 = pneg %p63
        %s222 = sand.u32 %s83, 1
        %s223 = scalar_lea.sflag [#allocation7], %s222
        %s224 = sand.u32 %s83, 1
        %s225 = smul.addr %s224, 8
        %s226 = scalar_lea.vmem [#allocation6], %s225
        %p227 = pneg %p96
        %p228 = pneg %p93
        %p229 = pneg %p124
        %p230 = pneg %p121
        %s231 = sand.u32 %s111, 1
        %s232 = scalar_lea.sflag [#allocation5], %s231
        %s233 = sand.u32 %s111, 1
        %s234 = smul.addr %s233, 8
        %s235 = scalar_lea.vmem [#allocation8], %s234
        %s236 = sadd.s32 %s28, %s29
        %s237 = sadd.s32 %s28, %s29
        %p238 = scmp.eq.s32.totalorder %s29, 0
        // Predicated region
        $region37: #{tpu_custom_call.1} parent=27 // pred_check
          %p239 = pneg %p238
        $region38: #{tpu_custom_call.1} parent=27 // pred_check_branch
          %241 = sbr.rel (%p239) target = $region40
        $region39: #{tpu_custom_call.1} parent=27 // pred_region
          %242 = vst [vmem:[#allocation2] sm:$0xff] 0.0
        $region40: #{tpu_custom_call.1} parent=27 // pred_fallthru
          _
        %v243 = vld [vmem:[%s209] sm:$0xff]
        %v244 = vld [vmem:[%s199] sm:$0xff]
        %s245 = scalar_lea.vmem %s199, 8 [#allocation3]
        %v246 = vld [vmem:[%s245] sm:$0xff]
        %v247 = vmax.f32 %v244, %v246
        %s248 = scalar_lea.vmem %s199, 16 [#allocation3]
        %v249 = vld [vmem:[%s248] sm:$0xff]
        %v250 = vmax.f32 %v247, %v249
        %s251 = scalar_lea.vmem %s199, 24 [#allocation3]
        %v252 = vld [vmem:[%s251] sm:$0xff]
        %v253 = vmax.f32 %v250, %v252
        %v254 = vsub.f32 %v244, %v253
        %v255 = vmul.f32 %v254, 1.442695
        %v256 = vpow.pop %v255
        %v257 = vadd.f32 %v256, 0.0
        %vm258 = vcmp.eq.s32.totalorder %v243, 0
        %v259 = vsel %vm258, %v244, 0.0
        %v260 = vadd.f32 %v259, 0.0
        %v261 = vsub.f32 %v246, %v253
        %v262 = vmul.f32 %v261, 1.442695
        %v263 = vpow.pop %v262
        %v264 = vadd.f32 %v257, %v263
        %vm265 = vcmp.eq.s32.totalorder %v243, 1
        %v266 = vsel %vm265, %v246, 0.0
        %v267 = vadd.f32 %v260, %v266
        %v268 = vsub.f32 %v249, %v253
        %v269 = vmul.f32 %v268, 1.442695
        %v270 = vpow.pop %v269
        %v271 = vadd.f32 %v264, %v270
        %vm272 = vcmp.eq.s32.totalorder %v243, 2
        %v273 = vsel %vm272, %v249, 0.0
        %v274 = vadd.f32 %v267, %v273
        %v275 = vsub.f32 %v252, %v253
        %v276 = vmul.f32 %v275, 1.442695
        %v277 = vpow.pop %v276
        %v278 = vadd.f32 %v271, %v277
        %vm279 = vcmp.eq.s32.totalorder %v243, 3
        %v280 = vsel %vm279, %v252, 0.0
        %v281 = vadd.f32 %v274, %v280
        %v282 = vlog2.pop %v278
        %v283 = vmul.f32 %v282, 0.6931472
        %v284 = vadd.f32 %v253, %v283
        %v285 = vsub.f32 %v284, %v281
        %v286 = vlaneseq
        %v287 = vshrl.u32 %v286, 7
        %v288 = vlaneseq
        %v289 = vand.u32 %v288, 127
        %s290 = sadd.s32 %s28, %s29
        %s291 = smul.u32 %s290, 8
        %v292 = vstv %s291
        %v293 = vadd.s32 %v292, %v287
        %v294 = vmul.u32 %v293, 128
        %v295 = vadd.s32 %v294, %v289
        %vm296 = vcmp.lt.s32.totalorder %v295, 256
        %v297 = vsel %vm296, %v285, 0.0
        %v298 = vld [vmem:[#allocation2] sm:$0xff]
        %v299 = vadd.f32 %v298, %v297
        %300 = vst [vmem:[#allocation2] sm:$0xff] %v299
        // Predicated region
        $region41: #{tpu_custom_call.1} parent=27 // pred_check
          %p301 = pneg %p238
        $region42: #{tpu_custom_call.1} parent=27 // pred_check_branch
          %303 = sbr.rel (%p301) target = $region44
        $region43: #{tpu_custom_call.1} parent=27 // pred_region
          %v304 = vld [vmem:[#allocation2] sm:$0xff]
          %305 = vst [vmem:[%s235] sm:$0xff] %v304
        $region44: #{tpu_custom_call.1} parent=27 // pred_fallthru
          _
        %s306 = sand.u32 %s111, 1
        %s307 = scalar_lea.sflag [#allocation5], %s306
        %s308 = sand.u32 %s111, 1
        %s309 = smul.addr %s308, 8
        %s310 = scalar_lea.vmem [#allocation8], %s309
        // Predicated region
        $region45: #{tpu_custom_call.1} parent=27 // pred_check
          %p311 = pneg %p121
        $region46: #{tpu_custom_call.1} parent=27 // pred_check_branch
          %313 = sbr.rel (%p311) target = $region48
        $region47: #{tpu_custom_call.1} parent=27 // pred_region
          %315 = vsyncadd %s307, 0
          %s316 = sadd.s32 %s28, %s27
          %s317 = smul.addr %s316, 8
          %s318 = scalar_lea.hbm %s2, %s317
          %s320 = sshll.u32 %s310, 4
          %s321 = int_to_ptr.vmem [resolvable:$true] %s320
          %s322 = sshll.u32 %s318, 4
          %s323 = int_to_ptr.hbm [resolvable:$true] %s322
          %325 = dma.vmem_to_hbm [thread:$0]  %s321, 128, %s323, %s307
        $region48: #{tpu_custom_call.1} parent=27 // pred_fallthru
          _
      $region28: #{tpu_custom_call.1} parent=5 // pred_fallthru
        _
      %p326 = scmp.le.s32.totalorder 2, %s17
      // Predicated region
      $region49: #{tpu_custom_call.1} parent=5 // pred_check
        %p327 = pneg %p326
      $region50: #{tpu_custom_call.1} parent=5 // pred_check_branch
        %329 = sbr.rel (%p327) target = $region52
      $region51: #{tpu_custom_call.1} parent=5 // pred_region
        %s330 = ssub.s32 %s17, 2
        // Predicated region
        $region53: #{tpu_custom_call.1} parent=51 // pred_check
          %p331 = pneg %p127
        $region54: #{tpu_custom_call.1} parent=51 // pred_check_branch
          %333 = sbr.rel (%p331) target = $region56
        $region55: #{tpu_custom_call.1} parent=51 // pred_region
          %s334 = sand.u32 %s112, 1
          %s335 = scalar_lea.sflag [#allocation5], %s334
          %s336 = sand.u32 %s112, 1
          %s337 = smul.addr %s336, 8
          %s338 = scalar_lea.vmem [#allocation8], %s337
          %340 = dma.done %s335, 128
        $region56: #{tpu_custom_call.1} parent=51 // pred_fallthru
          _
      $region52: #{tpu_custom_call.1} parent=5 // pred_fallthru
        _
    $region6: #{tpu_custom_call.1} parent=1 // loop_footer
      %s21 = sadd.s32 1, %s17
    $region7: #{tpu_custom_call.1} parent=1 // loop_footer_branch
      %16 = sbr.rel target = $region3
    $region8: #{tpu_custom_call.1} parent=1 // loop_exit
      _
    %341 = vsyncpa [#allocation4], 1
    %s342 = scalar_lea.sflag [#allocation4], 1
    %343 = vsyncpa %s342, 1
    %344 = vsyncpa [#allocation7], 1
    %s345 = scalar_lea.sflag [#allocation7], 1
    %346 = vsyncpa %s345, 1
    %347 = vsyncpa [#allocation5], 1
    %s348 = scalar_lea.sflag [#allocation5], 1
    %349 = vsyncpa %s348, 1

</llo_original>
